<compile_context>
chip_gen: v7x
topology: tpu7x:2x2x1
jax: 0.10.0
libtpu: 0.0.40
codegen_flags: <defaults>
</compile_context>

<pallas_src>
import math
import jax
import jax.numpy as jnp
from jax.experimental import pallas as pl
from jax.experimental.pallas import tpu as pltpu


def _make_soap_kernel(n_iter, dt, gamma, k_bulk, v_target, f_pad):
    """Returns the Pallas kernel body with static simulation parameters."""
    Fp = f_pad
    cg = -0.5 * gamma * dt          # folds dt and the 0.5 of dA/dx
    cpk = dt / 6.0                  # dt folded into the pressure prefactor

    # Helpers on 3-tuples of (1, Fp) rows (x/y/z kept in separate vregs).
    def _cross(a, b):
        ax, ay, az = a
        bx, by, bz = b
        return (ay * bz - az * by, az * bx - ax * bz, ax * by - ay * bx)

    def _sub(a, b):
        return tuple(x - y for x, y in zip(a, b))

    def _axpy(s, a, t, b):          # s*a + t*b componentwise
        return tuple(s * x + t * y for x, y in zip(a, b))

    def _dot3(a, b):
        return a[0] * b[0] + a[1] * b[1] + a[2] * b[2]

    def _split_hi_lo(rows):
        """f32 rows -> (hi, lo) bf16 rows; hi+lo keeps ~16 mantissa bits."""
        hi = tuple(r.astype(jnp.bfloat16) for r in rows)
        lo = tuple((r - h.astype(jnp.float32)).astype(jnp.bfloat16)
                   for r, h in zip(rows, hi))
        return hi, lo

    def kernel(verts_ref, m_hbm_ref, out_ref, m_vmem, dma_sem):
        # Single-buffered map: one explicit DMA into VMEM scratch, kept bf16.
        cp_m = pltpu.make_async_copy(m_hbm_ref, m_vmem, dma_sem)
        cp_m.start()
        cp_m.wait()

        def step(_, verts):
            m = m_vmem[...]                                    # (Vp, 3Fp) bf16

            # hi/lo bf16 split of the vertex slab; both bf16 gathers are exact
            # because the map is 0/1 and accumulation is f32.
            v_hi = verts.astype(jnp.bfloat16)
            v_lo = (verts - v_hi.astype(jnp.float32)).astype(jnp.bfloat16)
            v6 = jnp.concatenate([v_hi, v_lo], axis=0)         # (6, Vp) bf16

            g6 = jnp.dot(v6, m, preferred_element_type=jnp.float32)  # (6, 3Fp)

            def corner(k):                                     # 128-aligned lanes
                a, b = k * Fp, (k + 1) * Fp
                return tuple(g6[d:d + 1, a:b] + g6[3 + d:4 + d, a:b]
                             for d in range(3))

            v0, v1, v2 = corner(0), corner(1), corner(2)

            # Face normal (un-normalized = 2*area vector); rsqrt on the EUP.
            e1 = _sub(v1, v0)
            e2 = _sub(v2, v0)
            c = _cross(e1, e2)
            # Clamp keeps padded (zero-area) faces at exactly zero force.
            inv = jax.lax.rsqrt(jnp.maximum(_dot3(c, c), 1e-20))
            n = tuple(ci * inv for ci in c)

            #   dA/dv0 = 0.5*(cn_e2 - cn_e1), dA/dv1 = -0.5*cn_e2, dA/dv2 = 0.5*cn_e1
            cn_e1 = _cross(n, e1)
            cn_e2 = _cross(n, e2)

            # Volume gradients (divergence theorem): dV/dv0 = c12/6, etc.
            c12 = _cross(v1, v2)
            c20 = _cross(v2, v0)
            c01 = _cross(v0, v1)

            # Signed cell volume; padded faces contribute exactly 0.
            vol = (1.0 / 6.0) * jnp.sum(_dot3(v0, c12))
            pressure = -k_bulk * (vol - v_target) / v_target
            cp = pressure * cpk                                # dt folded in

            # Per-face, per-corner forces (dt already folded into cg / cp).
            f0 = _axpy(cg, _sub(cn_e2, cn_e1), cp, c12)
            f1 = _axpy(-cg, cn_e2, cp, c20)
            f2 = _axpy(cg, cn_e1, cp, c01)

            # hi/lo bf16 split of the nine force rows -> one (6, 3Fp) bf16 lhs,
            # one bf16 MXU contraction over the face axis (f32 accumulation).
            f0h, f0l = _split_hi_lo(f0)
            f1h, f1l = _split_hi_lo(f1)
            f2h, f2l = _split_hi_lo(f2)
            rows = ([jnp.concatenate([f0h[d], f1h[d], f2h[d]], axis=1)
                     for d in range(3)] +
                    [jnp.concatenate([f0l[d], f1l[d], f2l[d]], axis=1)
                     for d in range(3)])
            f6 = jnp.concatenate(rows, axis=0)                 # (6, 3Fp) bf16

            vf6 = jax.lax.dot_general(
                f6, m, dimension_numbers=(((1,), (1,)), ((), ())),
                preferred_element_type=jnp.float32)            # (6, Vp)
            vertex_forces = vf6[0:3, :] + vf6[3:6, :]          # (3, Vp) f32

            # static_nodes_mask is all-False in the reference -> no masking.
            return verts + vertex_forces

        out_ref[...] = jax.lax.fori_loop(0, n_iter, step, verts_ref[...])

    return kernel


def soap_bubble_forward(mesh_data,
                        n_forward_iterations=10,
                        time_step=30.0,
                        surface_tension=1.0,
                        target_cell_volume=1.0,
                        bulk_modulus=2500.0,
                        pressure=100.0):
    """JAX/Pallas equivalent of SoapBubble.forward."""
    vertices = jnp.asarray(mesh_data["vertices"], jnp.float32)   # (V, 3)
    faces = jnp.asarray(mesh_data["faces"], jnp.int32)           # (F, 3)
    V, F = vertices.shape[0], faces.shape[0]
    Vp = ((max(V, 1) + 127) // 128) * 128
    Fp = ((max(F, 1) + 127) // 128) * 128

    # Padded, coordinate-major vertex slab.
    verts_p = jnp.zeros((3, Vp), jnp.float32).at[:, :V].set(vertices.T)

    # Build the stacked 0/1 map [M0|M1|M2] directly in (Vp, 3Fp) bf16
    # orientation via iota==face-index comparisons (no one_hot/pad/transpose);
    # padded face columns compare against -1 and stay all-zero.
    row_ids = jax.lax.broadcasted_iota(jnp.int32, (Vp, Fp), 0)

    def corner_map(k):
        cols = jnp.full((Fp,), -1, jnp.int32).at[:F].set(faces[:, k])
        return (row_ids == cols[None, :]).astype(jnp.bfloat16)   # (Vp, Fp)

    m_stacked = jnp.concatenate(
        [corner_map(0), corner_map(1), corner_map(2)], axis=1)   # (Vp, 3Fp)

    scaled_target_volume = float(target_cell_volume) * math.exp(
        float(pressure) / float(bulk_modulus))

    kernel = _make_soap_kernel(
        int(n_forward_iterations), float(time_step), float(surface_tension),
        float(bulk_modulus), scaled_target_volume, Fp)

    # VMEM: one bf16 copy of the map (manual single-buffered DMA) + small
    # vertex buffers + elementwise temporaries; cap with ~28% headroom below
    # the physical per-core VMEM (64 MiB on v7x, 128 MiB on v5e/v6e).
    map_bytes = Vp * 3 * Fp * 2
    try:
        vmem_cap = int(getattr(pltpu.get_tpu_info(), "vmem_capacity_bytes",
                               64 << 20))
    except Exception:
        vmem_cap = 64 << 20
    need = map_bytes + 192 * Fp * 4 + 64 * Vp * 4 + (4 << 20)
    vmem_limit = int(max(16 << 20, min(need, int(0.72 * vmem_cap))))

    out = pl.pallas_call(
        kernel,
        out_shape=jax.ShapeDtypeStruct((3, Vp), jnp.float32),
        grid_spec=pltpu.PrefetchScalarGridSpec(
            num_scalar_prefetch=0,
            grid=(1,),
            in_specs=[pl.BlockSpec((3, Vp), lambda i: (0, 0)),
                      pl.BlockSpec(memory_space=pl.ANY)],
            out_specs=pl.BlockSpec((3, Vp), lambda i: (0, 0)),
            scratch_shapes=[pltpu.VMEM((Vp, 3 * Fp), jnp.bfloat16),
                            pltpu.SemaphoreType.DMA(())],
        ),
        compiler_params=pltpu.CompilerParams(
            dimension_semantics=("arbitrary",),
            vmem_limit_bytes=vmem_limit),
    )(verts_p, m_stacked)

    new_vertices = out[:, :V].T      # back to (V, 3), matching the module
    return {"vertices": new_vertices, "faces": faces}


if __name__ == "__main__":
    key = jax.random.PRNGKey(0)
    # Small closed mesh (octahedron, outward-oriented faces), deterministically
    # perturbed, scaled so its volume is near the target cell volume.
    base = jnp.array(
        [[1.0, 0.0, 0.0], [-1.0, 0.0, 0.0],
         [0.0, 1.0, 0.0], [0.0, -1.0, 0.0],
         [0.0, 0.0, 1.0], [0.0, 0.0, -1.0]], jnp.float32)
    vertices = 0.92 * base + 0.01 * jax.random.normal(key, base.shape, jnp.float32)
    faces = jnp.array(
        [[0, 2, 4], [2, 1, 4], [1, 3, 4], [3, 0, 4],
         [2, 0, 5], [1, 2, 5], [3, 1, 5], [0, 3, 5]], jnp.int32)

    mesh_data = {"vertices": vertices, "faces": faces}
    result = soap_bubble_forward(mesh_data)
    jax.block_until_ready(result["vertices"])
    assert result["vertices"].shape == (6, 3)
    assert result["faces"].shape == (8, 3)
    print("KERNEL_OK")
</pallas_src>

<mosaic_0001>
module attributes {stable_mosaic.version = 11 : i64} {
  func.func @kernel(%arg0: i32, %arg1: memref<3x128xf32, #tpu.memory_space<vmem>>, %arg2: memref<128x384xbf16, #tpu.memory_space<any>>, %arg3: memref<3x128xf32, #tpu.memory_space<vmem>>, %arg4: memref<128x384xbf16, #tpu.memory_space<vmem>>, %arg5: memref<!tpu.dma_semaphore, #tpu.memory_space<semaphore_mem>>) attributes {dimension_semantics = [#tpu.dimension_semantics<arbitrary>], iteration_bounds = array<i64: 1>, scalar_prefetch = 0 : i64, scratch_operands = 2 : i64, tpu.core_type = #tpu.core_type<tc>, window_params = [{pipeline_mode = #tpu.pipeline_mode<synchronous>, transform_indices = @transform_0, window_bounds = array<i64: 3, 128>}, {}, {pipeline_mode = #tpu.pipeline_mode<synchronous>, transform_indices = @transform_2, window_bounds = array<i64: 3, 128>}]} {
    tpu.enqueue_dma source(%arg2 : memref<128x384xbf16, #tpu.memory_space<any>>) target(%arg4 : memref<128x384xbf16, #tpu.memory_space<vmem>>) target_semaphore(%arg5 : memref<!tpu.dma_semaphore, #tpu.memory_space<semaphore_mem>>)
    tpu.wait_dma2 semaphore(%arg5 : memref<!tpu.dma_semaphore, #tpu.memory_space<semaphore_mem>>) src(%arg2 : memref<128x384xbf16, #tpu.memory_space<any>>) dst(%arg4 : memref<128x384xbf16, #tpu.memory_space<vmem>>)
    %c0 = arith.constant 0 : index
    %c0_0 = arith.constant 0 : index
    %0 = vector.load %arg1[%c0, %c0_0] : memref<3x128xf32, #tpu.memory_space<vmem>>, vector<3x128xf32>
    %c0_i32 = arith.constant 0 : i32
    %c10_i32 = arith.constant 10 : i32
    %1 = arith.addi %c0_i32, %c10_i32 : i32
    %c1_i32 = arith.constant 1 : i32
    %2 = scf.for %arg6 = %c0_i32 to %1 step %c1_i32 iter_args(%arg7 = %0) -> (vector<3x128xf32>)  : i32 {
      %c0_3 = arith.constant 0 : index
      %c0_4 = arith.constant 0 : index
      %4 = vector.load %arg4[%c0_3, %c0_4] : memref<128x384xbf16, #tpu.memory_space<vmem>>, vector<128x384xbf16>
      %5 = arith.truncf %arg7 : vector<3x128xf32> to vector<3x128xbf16>
      %6 = arith.extf %5 : vector<3x128xbf16> to vector<3x128xf32>
      %7 = arith.subf %arg7, %6 : vector<3x128xf32>
      %8 = arith.truncf %7 : vector<3x128xf32> to vector<3x128xbf16>
      %9 = tpu.concatenate %5, %8 in 0 : vector<3x128xbf16>, vector<3x128xbf16> -> vector<6x128xbf16>
      %cst = arith.constant dense<0.000000e+00> : vector<6x384xf32>
      %10 = tpu.matmul %9, %4, %cst {dimension_numbers = #tpu.dot_dimension_numbers<[1], [0], [0], [1], [0, 0, 1, 1], [], []>} : vector<6x128xbf16>, vector<128x384xbf16>, vector<6x384xf32> -> vector<6x384xf32>
      %11 = vector.extract_strided_slice %10 {offsets = [0, 0], sizes = [1, 128], strides = [1, 1]} : vector<6x384xf32> to vector<1x128xf32>
      %12 = vector.extract_strided_slice %10 {offsets = [3, 0], sizes = [1, 128], strides = [1, 1]} : vector<6x384xf32> to vector<1x128xf32>
      %13 = arith.addf %11, %12 : vector<1x128xf32>
      %14 = vector.extract_strided_slice %10 {offsets = [1, 0], sizes = [1, 128], strides = [1, 1]} : vector<6x384xf32> to vector<1x128xf32>
      %15 = vector.extract_strided_slice %10 {offsets = [4, 0], sizes = [1, 128], strides = [1, 1]} : vector<6x384xf32> to vector<1x128xf32>
      %16 = arith.addf %14, %15 : vector<1x128xf32>
      %17 = vector.extract_strided_slice %10 {offsets = [2, 0], sizes = [1, 128], strides = [1, 1]} : vector<6x384xf32> to vector<1x128xf32>
      %18 = vector.extract_strided_slice %10 {offsets = [5, 0], sizes = [1, 128], strides = [1, 1]} : vector<6x384xf32> to vector<1x128xf32>
      %19 = arith.addf %17, %18 : vector<1x128xf32>
      %20 = vector.extract_strided_slice %10 {offsets = [0, 128], sizes = [1, 128], strides = [1, 1]} : vector<6x384xf32> to vector<1x128xf32>
      %21 = vector.extract_strided_slice %10 {offsets = [3, 128], sizes = [1, 128], strides = [1, 1]} : vector<6x384xf32> to vector<1x128xf32>
      %22 = arith.addf %20, %21 : vector<1x128xf32>
      %23 = vector.extract_strided_slice %10 {offsets = [1, 128], sizes = [1, 128], strides = [1, 1]} : vector<6x384xf32> to vector<1x128xf32>
      %24 = vector.extract_strided_slice %10 {offsets = [4, 128], sizes = [1, 128], strides = [1, 1]} : vector<6x384xf32> to vector<1x128xf32>
      %25 = arith.addf %23, %24 : vector<1x128xf32>
      %26 = vector.extract_strided_slice %10 {offsets = [2, 128], sizes = [1, 128], strides = [1, 1]} : vector<6x384xf32> to vector<1x128xf32>
      %27 = vector.extract_strided_slice %10 {offsets = [5, 128], sizes = [1, 128], strides = [1, 1]} : vector<6x384xf32> to vector<1x128xf32>
      %28 = arith.addf %26, %27 : vector<1x128xf32>
      %29 = vector.extract_strided_slice %10 {offsets = [0, 256], sizes = [1, 128], strides = [1, 1]} : vector<6x384xf32> to vector<1x128xf32>
      %30 = vector.extract_strided_slice %10 {offsets = [3, 256], sizes = [1, 128], strides = [1, 1]} : vector<6x384xf32> to vector<1x128xf32>
      %31 = arith.addf %29, %30 : vector<1x128xf32>
      %32 = vector.extract_strided_slice %10 {offsets = [1, 256], sizes = [1, 128], strides = [1, 1]} : vector<6x384xf32> to vector<1x128xf32>
      %33 = vector.extract_strided_slice %10 {offsets = [4, 256], sizes = [1, 128], strides = [1, 1]} : vector<6x384xf32> to vector<1x128xf32>
      %34 = arith.addf %32, %33 : vector<1x128xf32>
      %35 = vector.extract_strided_slice %10 {offsets = [2, 256], sizes = [1, 128], strides = [1, 1]} : vector<6x384xf32> to vector<1x128xf32>
      %36 = vector.extract_strided_slice %10 {offsets = [5, 256], sizes = [1, 128], strides = [1, 1]} : vector<6x384xf32> to vector<1x128xf32>
      %37 = arith.addf %35, %36 : vector<1x128xf32>
      %38 = arith.subf %22, %13 : vector<1x128xf32>
      %39 = arith.subf %25, %16 : vector<1x128xf32>
      %40 = arith.subf %28, %19 : vector<1x128xf32>
      %41 = arith.subf %31, %13 : vector<1x128xf32>
      %42 = arith.subf %34, %16 : vector<1x128xf32>
      %43 = arith.subf %37, %19 : vector<1x128xf32>
      %44 = arith.mulf %39, %43 : vector<1x128xf32>
      %45 = arith.mulf %40, %42 : vector<1x128xf32>
      %46 = arith.subf %44, %45 : vector<1x128xf32>
      %47 = arith.mulf %40, %41 : vector<1x128xf32>
      %48 = arith.mulf %38, %43 : vector<1x128xf32>
      %49 = arith.subf %47, %48 : vector<1x128xf32>
      %50 = arith.mulf %38, %42 : vector<1x128xf32>
      %51 = arith.mulf %39, %41 : vector<1x128xf32>
      %52 = arith.subf %50, %51 : vector<1x128xf32>
      %53 = arith.mulf %46, %46 : vector<1x128xf32>
      %54 = arith.mulf %49, %49 : vector<1x128xf32>
      %55 = arith.addf %53, %54 : vector<1x128xf32>
      %56 = arith.mulf %52, %52 : vector<1x128xf32>
      %57 = arith.addf %55, %56 : vector<1x128xf32>
      %cst_5 = arith.constant 9.99999968E-21 : f32
      %58 = vector.broadcast %cst_5 : f32 to vector<1x128xf32>
      %59 = arith.maximumf %57, %58 : vector<1x128xf32>
      %60 = math.rsqrt %59 : vector<1x128xf32>
      %61 = arith.mulf %46, %60 : vector<1x128xf32>
      %62 = arith.mulf %49, %60 : vector<1x128xf32>
      %63 = arith.mulf %52, %60 : vector<1x128xf32>
      %64 = arith.mulf %62, %40 : vector<1x128xf32>
      %65 = arith.mulf %63, %39 : vector<1x128xf32>
      %66 = arith.subf %64, %65 : vector<1x128xf32>
      %67 = arith.mulf %63, %38 : vector<1x128xf32>
      %68 = arith.mulf %61, %40 : vector<1x128xf32>
      %69 = arith.subf %67, %68 : vector<1x128xf32>
      %70 = arith.mulf %61, %39 : vector<1x128xf32>
      %71 = arith.mulf %62, %38 : vector<1x128xf32>
      %72 = arith.subf %70, %71 : vector<1x128xf32>
      %73 = arith.mulf %62, %43 : vector<1x128xf32>
      %74 = arith.mulf %63, %42 : vector<1x128xf32>
      %75 = arith.subf %73, %74 : vector<1x128xf32>
      %76 = arith.mulf %63, %41 : vector<1x128xf32>
      %77 = arith.mulf %61, %43 : vector<1x128xf32>
      %78 = arith.subf %76, %77 : vector<1x128xf32>
      %79 = arith.mulf %61, %42 : vector<1x128xf32>
      %80 = arith.mulf %62, %41 : vector<1x128xf32>
      %81 = arith.subf %79, %80 : vector<1x128xf32>
      %82 = arith.mulf %25, %37 : vector<1x128xf32>
      %83 = arith.mulf %28, %34 : vector<1x128xf32>
      %84 = arith.subf %82, %83 : vector<1x128xf32>
      %85 = arith.mulf %28, %31 : vector<1x128xf32>
      %86 = arith.mulf %22, %37 : vector<1x128xf32>
      %87 = arith.subf %85, %86 : vector<1x128xf32>
      %88 = arith.mulf %22, %34 : vector<1x128xf32>
      %89 = arith.mulf %25, %31 : vector<1x128xf32>
      %90 = arith.subf %88, %89 : vector<1x128xf32>
      %91 = arith.mulf %34, %19 : vector<1x128xf32>
      %92 = arith.mulf %37, %16 : vector<1x128xf32>
      %93 = arith.subf %91, %92 : vector<1x128xf32>
      %94 = arith.mulf %37, %13 : vector<1x128xf32>
      %95 = arith.mulf %31, %19 : vector<1x128xf32>
      %96 = arith.subf %94, %95 : vector<1x128xf32>
      %97 = arith.mulf %31, %16 : vector<1x128xf32>
      %98 = arith.mulf %34, %13 : vector<1x128xf32>
      %99 = arith.subf %97, %98 : vector<1x128xf32>
      %100 = arith.mulf %16, %28 : vector<1x128xf32>
      %101 = arith.mulf %19, %25 : vector<1x128xf32>
      %102 = arith.subf %100, %101 : vector<1x128xf32>
      %103 = arith.mulf %19, %22 : vector<1x128xf32>
      %104 = arith.mulf %13, %28 : vector<1x128xf32>
      %105 = arith.subf %103, %104 : vector<1x128xf32>
      %106 = arith.mulf %13, %25 : vector<1x128xf32>
      %107 = arith.mulf %16, %22 : vector<1x128xf32>
      %108 = arith.subf %106, %107 : vector<1x128xf32>
      %109 = arith.mulf %13, %84 : vector<1x128xf32>
      %110 = arith.mulf %16, %87 : vector<1x128xf32>
      %111 = arith.addf %109, %110 : vector<1x128xf32>
      %112 = arith.mulf %19, %90 : vector<1x128xf32>
      %113 = arith.addf %111, %112 : vector<1x128xf32>
      %114 = vector.shape_cast %113 : vector<1x128xf32> to vector<1x1x128xf32>
      %cst_6 = arith.constant dense<0.000000e+00> : vector<1xf32>
      %115 = vector.multi_reduction <add>, %114, %cst_6 [1, 2] : vector<1x1x128xf32> to vector<1xf32>
      %116 = vector.shape_cast %115 : vector<1xf32> to vector<1x1x1xf32>
      %117 = vector.extract %116[0, 0, 0] : f32 from vector<1x1x1xf32>
      %cst_7 = arith.constant 0.166666672 : f32
      %118 = arith.mulf %cst_7, %117 : f32
      %cst_8 = arith.constant 1.04081082 : f32
      %119 = arith.subf %118, %cst_8 : f32
      %cst_9 = arith.constant -2.500000e+03 : f32
      %120 = arith.mulf %cst_9, %119 : f32
      %cst_10 = arith.constant 1.04081082 : f32
      %121 = arith.divf %120, %cst_10 : f32
      %cst_11 = arith.constant 5.000000e+00 : f32
      %122 = arith.mulf %121, %cst_11 : f32
      %123 = arith.subf %75, %66 : vector<1x128xf32>
      %124 = arith.subf %78, %69 : vector<1x128xf32>
      %125 = arith.subf %81, %72 : vector<1x128xf32>
      %cst_12 = arith.constant -1.500000e+01 : f32
      %126 = vector.broadcast %cst_12 : f32 to vector<1x128xf32>
      %127 = arith.mulf %126, %123 : vector<1x128xf32>
      %128 = vector.broadcast %122 : f32 to vector<1x128xf32>
      %129 = arith.mulf %128, %84 : vector<1x128xf32>
      %130 = arith.addf %127, %129 : vector<1x128xf32>
      %cst_13 = arith.constant -1.500000e+01 : f32
      %131 = vector.broadcast %cst_13 : f32 to vector<1x128xf32>
      %132 = arith.mulf %131, %124 : vector<1x128xf32>
      %133 = vector.broadcast %122 : f32 to vector<1x128xf32>
      %134 = arith.mulf %133, %87 : vector<1x128xf32>
      %135 = arith.addf %132, %134 : vector<1x128xf32>
      %cst_14 = arith.constant -1.500000e+01 : f32
      %136 = vector.broadcast %cst_14 : f32 to vector<1x128xf32>
      %137 = arith.mulf %136, %125 : vector<1x128xf32>
      %138 = vector.broadcast %122 : f32 to vector<1x128xf32>
      %139 = arith.mulf %138, %90 : vector<1x128xf32>
      %140 = arith.addf %137, %139 : vector<1x128xf32>
      %cst_15 = arith.constant 1.500000e+01 : f32
      %141 = vector.broadcast %cst_15 : f32 to vector<1x128xf32>
      %142 = arith.mulf %141, %75 : vector<1x128xf32>
      %143 = vector.broadcast %122 : f32 to vector<1x128xf32>
      %144 = arith.mulf %143, %93 : vector<1x128xf32>
      %145 = arith.addf %142, %144 : vector<1x128xf32>
      %cst_16 = arith.constant 1.500000e+01 : f32
      %146 = vector.broadcast %cst_16 : f32 to vector<1x128xf32>
      %147 = arith.mulf %146, %78 : vector<1x128xf32>
      %148 = vector.broadcast %122 : f32 to vector<1x128xf32>
      %149 = arith.mulf %148, %96 : vector<1x128xf32>
      %150 = arith.addf %147, %149 : vector<1x128xf32>
      %cst_17 = arith.constant 1.500000e+01 : f32
      %151 = vector.broadcast %cst_17 : f32 to vector<1x128xf32>
      %152 = arith.mulf %151, %81 : vector<1x128xf32>
      %153 = vector.broadcast %122 : f32 to vector<1x128xf32>
      %154 = arith.mulf %153, %99 : vector<1x128xf32>
      %155 = arith.addf %152, %154 : vector<1x128xf32>
      %cst_18 = arith.constant -1.500000e+01 : f32
      %156 = vector.broadcast %cst_18 : f32 to vector<1x128xf32>
      %157 = arith.mulf %156, %66 : vector<1x128xf32>
      %158 = vector.broadcast %122 : f32 to vector<1x128xf32>
      %159 = arith.mulf %158, %102 : vector<1x128xf32>
      %160 = arith.addf %157, %159 : vector<1x128xf32>
      %cst_19 = arith.constant -1.500000e+01 : f32
      %161 = vector.broadcast %cst_19 : f32 to vector<1x128xf32>
      %162 = arith.mulf %161, %69 : vector<1x128xf32>
      %163 = vector.broadcast %122 : f32 to vector<1x128xf32>
      %164 = arith.mulf %163, %105 : vector<1x128xf32>
      %165 = arith.addf %162, %164 : vector<1x128xf32>
      %cst_20 = arith.constant -1.500000e+01 : f32
      %166 = vector.broadcast %cst_20 : f32 to vector<1x128xf32>
      %167 = arith.mulf %166, %72 : vector<1x128xf32>
      %168 = vector.broadcast %122 : f32 to vector<1x128xf32>
      %169 = arith.mulf %168, %108 : vector<1x128xf32>
      %170 = arith.addf %167, %169 : vector<1x128xf32>
      %171 = arith.truncf %130 : vector<1x128xf32> to vector<1x128xbf16>
      %172 = arith.truncf %135 : vector<1x128xf32> to vector<1x128xbf16>
      %173 = arith.truncf %140 : vector<1x128xf32> to vector<1x128xbf16>
      %174 = arith.extf %171 : vector<1x128xbf16> to vector<1x128xf32>
      %175 = arith.subf %130, %174 : vector<1x128xf32>
      %176 = arith.truncf %175 : vector<1x128xf32> to vector<1x128xbf16>
      %177 = arith.extf %172 : vector<1x128xbf16> to vector<1x128xf32>
      %178 = arith.subf %135, %177 : vector<1x128xf32>
      %179 = arith.truncf %178 : vector<1x128xf32> to vector<1x128xbf16>
      %180 = arith.extf %173 : vector<1x128xbf16> to vector<1x128xf32>
      %181 = arith.subf %140, %180 : vector<1x128xf32>
      %182 = arith.truncf %181 : vector<1x128xf32> to vector<1x128xbf16>
      %183 = arith.truncf %145 : vector<1x128xf32> to vector<1x128xbf16>
      %184 = arith.truncf %150 : vector<1x128xf32> to vector<1x128xbf16>
      %185 = arith.truncf %155 : vector<1x128xf32> to vector<1x128xbf16>
      %186 = arith.extf %183 : vector<1x128xbf16> to vector<1x128xf32>
      %187 = arith.subf %145, %186 : vector<1x128xf32>
      %188 = arith.truncf %187 : vector<1x128xf32> to vector<1x128xbf16>
      %189 = arith.extf %184 : vector<1x128xbf16> to vector<1x128xf32>
      %190 = arith.subf %150, %189 : vector<1x128xf32>
      %191 = arith.truncf %190 : vector<1x128xf32> to vector<1x128xbf16>
      %192 = arith.extf %185 : vector<1x128xbf16> to vector<1x128xf32>
      %193 = arith.subf %155, %192 : vector<1x128xf32>
      %194 = arith.truncf %193 : vector<1x128xf32> to vector<1x128xbf16>
      %195 = arith.truncf %160 : vector<1x128xf32> to vector<1x128xbf16>
      %196 = arith.truncf %165 : vector<1x128xf32> to vector<1x128xbf16>
      %197 = arith.truncf %170 : vector<1x128xf32> to vector<1x128xbf16>
      %198 = arith.extf %195 : vector<1x128xbf16> to vector<1x128xf32>
      %199 = arith.subf %160, %198 : vector<1x128xf32>
      %200 = arith.truncf %199 : vector<1x128xf32> to vector<1x128xbf16>
      %201 = arith.extf %196 : vector<1x128xbf16> to vector<1x128xf32>
      %202 = arith.subf %165, %201 : vector<1x128xf32>
      %203 = arith.truncf %202 : vector<1x128xf32> to vector<1x128xbf16>
      %204 = arith.extf %197 : vector<1x128xbf16> to vector<1x128xf32>
      %205 = arith.subf %170, %204 : vector<1x128xf32>
      %206 = arith.truncf %205 : vector<1x128xf32> to vector<1x128xbf16>
      %207 = tpu.concatenate %171, %183, %195 in 1 : vector<1x128xbf16>, vector<1x128xbf16>, vector<1x128xbf16> -> vector<1x384xbf16>
      %208 = tpu.concatenate %172, %184, %196 in 1 : vector<1x128xbf16>, vector<1x128xbf16>, vector<1x128xbf16> -> vector<1x384xbf16>
      %209 = tpu.concatenate %173, %185, %197 in 1 : vector<1x128xbf16>, vector<1x128xbf16>, vector<1x128xbf16> -> vector<1x384xbf16>
      %210 = tpu.concatenate %176, %188, %200 in 1 : vector<1x128xbf16>, vector<1x128xbf16>, vector<1x128xbf16> -> vector<1x384xbf16>
      %211 = tpu.concatenate %179, %191, %203 in 1 : vector<1x128xbf16>, vector<1x128xbf16>, vector<1x128xbf16> -> vector<1x384xbf16>
      %212 = tpu.concatenate %182, %194, %206 in 1 : vector<1x128xbf16>, vector<1x128xbf16>, vector<1x128xbf16> -> vector<1x384xbf16>
      %213 = tpu.concatenate %207, %208, %209, %210, %211, %212 in 0 : vector<1x384xbf16>, vector<1x384xbf16>, vector<1x384xbf16>, vector<1x384xbf16>, vector<1x384xbf16>, vector<1x384xbf16> -> vector<6x384xbf16>
      %cst_21 = arith.constant dense<0.000000e+00> : vector<6x128xf32>
      %214 = tpu.matmul %213, %4, %cst_21 {dimension_numbers = #tpu.dot_dimension_numbers<[1], [1], [0], [0], [0, 0, 1, 0], [], []>} : vector<6x384xbf16>, vector<128x384xbf16>, vector<6x128xf32> -> vector<6x128xf32>
      %215 = vector.extract_strided_slice %214 {offsets = [0, 0], sizes = [3, 128], strides = [1, 1]} : vector<6x128xf32> to vector<3x128xf32>
      %216 = vector.extract_strided_slice %214 {offsets = [3, 0], sizes = [3, 128], strides = [1, 1]} : vector<6x128xf32> to vector<3x128xf32>
      %217 = arith.addf %215, %216 : vector<3x128xf32>
      %218 = arith.addf %arg7, %217 : vector<3x128xf32>
      scf.yield %218 : vector<3x128xf32>
    }
    %c0_1 = arith.constant 0 : index
    %c0_2 = arith.constant 0 : index
    %3 = vector.load %arg3[%c0_1, %c0_2] : memref<3x128xf32, #tpu.memory_space<vmem>>, vector<3x128xf32>
    tpu.vector_store %arg3[%c0_1, %c0_2], %2 {strides = array<i32>} : memref<3x128xf32, #tpu.memory_space<vmem>>, vector<3x128xf32>,
    return
  }
  func.func @transform_0(%arg0: i32) -> (i32, i32) {
    %c0_i32 = arith.constant 0 : i32
    %c0_i32_0 = arith.constant 0 : i32
    %c0_i32_1 = arith.constant 0 : i32
    return %c0_i32, %c0_i32_0 : i32, i32
  }
  func.func @transform_2(%arg0: i32) -> (i32, i32) {
    %c0_i32 = arith.constant 0 : i32
    %c0_i32_0 = arith.constant 0 : i32
    %c0_i32_1 = arith.constant 0 : i32
    return %c0_i32, %c0_i32_0 : i32, i32
  }
}

</mosaic_0001>

<llo_original>
// kernel: tpu_custom_call.1
$region0: #{tpu_custom_call.1}
  #allocation0 [shape = 'u32[]', space=smem, size = 0x4, offset = 0x4, fixed_abs, tag = 'smem constant byte address 0x4 - core index']
  #allocation1 [shape = 'u32[144,128]{1,0:T(1,128)}', space=vmem, size = 0x12000, scoped, tag = 'internal scratch']
  #allocation2 [shape = 'bf16[128,384]{1,0:T(16,128)(2,1)}', space=vmem, size = 0x18000, scoped, tag = 'scratch operand']
  #allocation3 [shape = 's32[1]{0}', space=sflag, size = 0x4, scoped, tag = 'scratch operand']
  #allocation8 [shape = 's32[]', space=sflag, size = 0x4, offset = 0, fixed_abs, tag = 'sflag constant byte address 0x0 - dummy sync flag']
  %s0 = inlined_call_operand.hbm [shape: f32[3,128], index: 0, kind: input, shape index: {}]
  %s1 = inlined_call_operand.hbm [shape: bf16[128,384], index: 1, kind: input, shape index: {}]
  %s2 = inlined_call_operand.hbm [shape: f32[3,128], index: 2, kind: output, shape index: {}]
  %s3 = sld [smem:[#allocation0]]
  $region25: #{tpu_custom_call.1} parent=0
    _
  %s5 = ssub.s32 1, %s3
  %s6 = scalar_select 0, %s5, %s3
  $region1: #{tpu_custom_call.1} parent=0
    #allocation4 [shape = 'u8[2048]{0}', space=vmem, size = 0x800, scoped, tag = 'input window, operand 0, single buffered']
    #allocation5 [shape = 's32[1]{0}', space=sflag, size = 0x4, scoped, tag = 'scoped memory for tpu_custom_call.1']
    #allocation6 [shape = 's32[1]{0}', space=sflag, size = 0x4, scoped, tag = 'scoped memory for tpu_custom_call.1']
    #allocation7 [shape = 'u8[2048]{0}', space=vmem, size = 0x800, scoped, tag = 'output window, operand 0, single buffered']
    #allocation9 [shape = 'u32[9]{0}', space=smem, size = 0x24, scoped, tag = 'DMA stride descriptor']
    %7 = vsyncpa [#allocation5], 0
    %8 = vsyncpa [#allocation6], 0
    // Predicated region
    $region2: #{tpu_custom_call.1} parent=1 // pred_check
      _
    $region3: #{tpu_custom_call.1} parent=1 // pred_check_branch
      %10 = sbr.rel (0) target = $region5
    $region4: #{tpu_custom_call.1} parent=1 // pred_region
      %s12 = ssub.s32 64, 64
      %13 = vsyncadd [#allocation5], %s12
      %s15 = sshll.u32 [#allocation4], 4
      %s16 = int_to_ptr.vmem [resolvable:$true] %s15
      %18 = dma.hbm_to_vmem [thread:$0]  %s0, 64, %s16, [#allocation5]
    $region5: #{tpu_custom_call.1} parent=1 // pred_fallthru
      _
    // Predicated region
    $region6: #{tpu_custom_call.1} parent=1 // pred_check
      _
    $region7: #{tpu_custom_call.1} parent=1 // pred_check_branch
      %20 = sbr.rel (0) target = $region9
    $region8: #{tpu_custom_call.1} parent=1 // pred_region
      %21 = dma.done [#allocation5], 64
    $region9: #{tpu_custom_call.1} parent=1 // pred_fallthru
      _
    %s24 = sshll.u32 1, 14
    %s25 = sxor.u32 4294967295, %s24
    %s27 = sld [smem:[#allocation0]]
    %s28 = sadd.s32 2, %s27
    %s30 = sshll.u32 7, 26
    %s31 = sxor.u32 4294967295, %s30
    %s32 = sand.u32 0, %s31
    %s33 = sshll.u32 %s28, 26
    %s34 = sor.u32 %s32, %s33
    %s35 = sshll.u32 [#allocation2], 4
    %s36 = int_to_ptr.vmem [resolvable:$true] %s35
    %39 = sst [smem:[#allocation9]] 384
    %s40 = scalar_lea.smem [#allocation9], 1
    %41 = sst [smem:[%s40]] 384
    %s42 = scalar_lea.smem [#allocation9], 2
    %43 = sst [smem:[%s42]] 3
    %s44 = scalar_lea.smem [#allocation9], 3
    %45 = sst [smem:[%s44]] 64
    %s46 = scalar_lea.smem [#allocation9], 4
    %47 = sst [smem:[%s46]] 128
    %s48 = scalar_lea.smem [#allocation9], 5
    %49 = sst [smem:[%s48]] 2
    %s50 = scalar_lea.smem [#allocation9], 6
    %51 = sst [smem:[%s50]] 192
    %s52 = scalar_lea.smem [#allocation9], 7
    %53 = sst [smem:[%s52]] 64
    %s54 = scalar_lea.smem [#allocation9], 8
    %55 = sst [smem:[%s54]] 4
    %57 = dma.general %s1, 3072, %s36, [#allocation3], [#allocation8], [#allocation9], %s34, 0
    %s58 = smul.u32 4, 16
    %s59 = smul.u32 %s58, 3
    %s60 = sshll.u32 %s59, 4
    %61 = dma.done [#allocation3], %s60
    %v62 = vld [vmem:[#allocation4] sm:$0x7]
    loop: start=0, step=1, limit=10
    $region10: #{tpu_custom_call.1} parent=1 // loop_pre_header
      _
    $region11: #{tpu_custom_call.1} parent=1 // loop_header
      %s64 = sphi 0, %s68
      %p65 = scmp.ge.s32.totalorder %s64, 10
      %v69 = vphi %v62, %v654
    $region12: #{tpu_custom_call.1} parent=1 // loop_header_branch
      %67 = sbr.rel (%p65) target = $region16
    $region13: #{tpu_custom_call.1} parent=1 // loop_body
      %v70 = vld [vmem:[#allocation2] sm:$0xff]
      %v71 = vld [vmem:[#allocation2 + $0x8] sm:$0xff]
      %v72 = vld [vmem:[#allocation2 + $0x10] sm:$0xff]
      %v73 = vld [vmem:[#allocation2 + $0x18] sm:$0xff]
      %v74 = vld [vmem:[#allocation2 + $0x20] sm:$0xff]
      %v75 = vld [vmem:[#allocation2 + $0x28] sm:$0xff]
      %v76 = vld [vmem:[#allocation2 + $0x30] sm:$0xff]
      %v77 = vld [vmem:[#allocation2 + $0x38] sm:$0xff]
      %v78 = vld [vmem:[#allocation2 + $0x40] sm:$0xff]
      %v79 = vld [vmem:[#allocation2 + $0x48] sm:$0xff]
      %v80 = vld [vmem:[#allocation2 + $0x50] sm:$0xff]
      %v81 = vld [vmem:[#allocation2 + $0x58] sm:$0xff]
      %v82 = vld [vmem:[#allocation2 + $0x60] sm:$0xff]
      %v83 = vld [vmem:[#allocation2 + $0x68] sm:$0xff]
      %v84 = vld [vmem:[#allocation2 + $0x70] sm:$0xff]
      %v85 = vld [vmem:[#allocation2 + $0x78] sm:$0xff]
      %v86 = vld [vmem:[#allocation2 + $0x80] sm:$0xff]
      %v87 = vld [vmem:[#allocation2 + $0x88] sm:$0xff]
      %v88 = vld [vmem:[#allocation2 + $0x90] sm:$0xff]
      %v89 = vld [vmem:[#allocation2 + $0x98] sm:$0xff]
      %v90 = vld [vmem:[#allocation2 + $0xa0] sm:$0xff]
      %v91 = vld [vmem:[#allocation2 + $0xa8] sm:$0xff]
      %v92 = vld [vmem:[#allocation2 + $0xb0] sm:$0xff]
      %v93 = vld [vmem:[#allocation2 + $0xb8] sm:$0xff]
      %v94 = vpack.c.bf16 %v69, %v69
      %v95 = vunpack.c.l.bf16 %v94
      %v96 = vsub.f32 %v69, %v95
      %v97 = vpack.c.bf16 %v96, %v96
      %v99 = vshrl.u32 %v97, 16
      %v101 = vrot.slane %v99, 6
      %v102 = vshll.u32 %v97, 16
      %v104 = vrot.slane %v102, 7
      %v105 = vor.u32 %v101, %v104
      %vm107 = vcmask 1041408
      %vm108 = vsmask.f32 1280
      %vm109 = vmand %vm107, %vm108
      %v110 = vsel %vm109, %v94, %v105
      %111 = vmatprep.subr.bf16.mxu0 %v71
      %112 = vmatpush1.bf16.msra.mxu0 %v70
      %113 = vmatprep.subr.bf16.mxu0 %v74
      %114 = vmatpush1.bf16.msra.mxu0 %v73
      %115 = vmatprep.subr.bf16.mxu0 %v77
      %116 = vmatpush1.bf16.msra.mxu0 %v76
      %117 = vmatprep.subr.bf16.mxu0 %v80
      %118 = vmatpush1.bf16.msra.mxu0 %v79
      %119 = vmatprep.subr.bf16.mxu0 %v83
      %120 = vmatpush1.bf16.msra.mxu0 %v82
      %121 = vmatprep.subr.bf16.mxu0 %v86
      %122 = vmatpush1.bf16.msra.mxu0 %v85
      %123 = vmatprep.subr.bf16.mxu0 %v89
      %124 = vmatpush1.bf16.msra.mxu0 %v88
      %125 = vmatprep.subr.bf16.mxu0 %v92
      %126 = vmatpush1.bf16.msra.mxu0 %v91
      %127 = vmatprep.subr.bf16.mxu0 0
      %128 = vmatpush1.bf16.msra.mxu0 0
      %129 = vmatprep.subr.bf16.mxu0 0
      %130 = vmatpush1.bf16.msra.mxu0 0
      %131 = vmatprep.subr.bf16.mxu0 0
      %132 = vmatpush1.bf16.msra.mxu0 0
      %133 = vmatprep.subr.bf16.mxu0 0
      %134 = vmatpush1.bf16.msra.mxu0 0
      %135 = vmatprep.subr.bf16.mxu0 0
      %136 = vmatpush1.bf16.msra.mxu0 0
      %137 = vmatprep.subr.bf16.mxu0 0
      %138 = vmatpush1.bf16.msra.mxu0 0
      %139 = vmatprep.subr.bf16.mxu0 0
      %140 = vmatpush1.bf16.msra.mxu0 0
      %141 = vmatprep.subr.bf16.mxu0 0
      %142 = vmatpush1.bf16.msra.mxu0 0
      %143 = vmatprep.mubr.bf16.mxu0 0
      %144 = vmatmul.mubr.bf16.gmra.mrb[0].mxu0 %v110
      %v145 = vpop.f32.mrb[0].mxu0
      %v146 = vadd.f32 0.0, %v145
      %v147 = vpop.f32.mrb[0].mxu0
      %v148 = vadd.f32 0.0, %v147
      %v149 = vpop.f32.mrb[0].mxu0
      %v150 = vpop.f32.mrb[0].mxu0
      %151 = vdwg.mxu0
      %152 = vmatprep.subr.bf16.mxu0 0
      %153 = vmatpush1.bf16.msra.mxu0 %v72
      %154 = vmatprep.subr.bf16.mxu0 0
      %155 = vmatpush1.bf16.msra.mxu0 %v75
      %156 = vmatprep.subr.bf16.mxu0 0
      %157 = vmatpush1.bf16.msra.mxu0 %v78
      %158 = vmatprep.subr.bf16.mxu0 0
      %159 = vmatpush1.bf16.msra.mxu0 %v81
      %160 = vmatprep.subr.bf16.mxu0 0
      %161 = vmatpush1.bf16.msra.mxu0 %v84
      %162 = vmatprep.subr.bf16.mxu0 0
      %163 = vmatpush1.bf16.msra.mxu0 %v87
      %164 = vmatprep.subr.bf16.mxu0 0
      %165 = vmatpush1.bf16.msra.mxu0 %v90
      %166 = vmatprep.subr.bf16.mxu0 0
      %167 = vmatpush1.bf16.msra.mxu0 %v93
      %168 = vmatprep.subr.bf16.mxu0 0
      %169 = vmatpush1.bf16.msra.mxu0 0
      %170 = vmatprep.subr.bf16.mxu0 0
      %171 = vmatpush1.bf16.msra.mxu0 0
      %172 = vmatprep.subr.bf16.mxu0 0
      %173 = vmatpush1.bf16.msra.mxu0 0
      %174 = vmatprep.subr.bf16.mxu0 0
      %175 = vmatpush1.bf16.msra.mxu0 0
      %176 = vmatprep.subr.bf16.mxu0 0
      %177 = vmatpush1.bf16.msra.mxu0 0
      %178 = vmatprep.subr.bf16.mxu0 0
      %179 = vmatpush1.bf16.msra.mxu0 0
      %180 = vmatprep.subr.bf16.mxu0 0
      %181 = vmatpush1.bf16.msra.mxu0 0
      %182 = vmatprep.subr.bf16.mxu0 0
      %183 = vmatpush1.bf16.msra.mxu0 0
      %184 = vmatprep.mubr.bf16.mxu0 0
      %185 = vmatmul.mubr.bf16.gmra.mrb[0].mxu0 %v110
      %v186 = vpop.f32.mrb[0].mxu0
      %v187 = vadd.f32 0.0, %v186
      %v188 = vpop.f32.mrb[0].mxu0
      %v189 = vpop.f32.mrb[0].mxu0
      %v190 = vpop.f32.mrb[0].mxu0
      %191 = vdwg.mxu0
      %v193 = vrot.slane %v146, 3
      %v195 = vadd.f32 %v146, %v193
      %v197 = vrot.slane %v148, 3
      %v199 = vadd.f32 %v148, %v197
      %v201 = vrot.slane %v187, 3
      %v203 = vadd.f32 %v187, %v201
      %v204 = vsub.f32 %v199, %v195
      %v205 = vsub.f32 %v203, %v195
      %v207 = vrot.slane %v205, 1
      %v209 = vmul.f32 %v204, %v207
      %v210 = vrot.slane %v205, 7
      %v212 = vmul.f32 %v204, %v210
      %v214 = vrot.slane %v212, 1
      %v216 = vsub.f32 %v209, %v214
      %v217 = vrot.slane %v205, 6
      %v219 = vmul.f32 %v204, %v217
      %v220 = vrot.slane %v205, 2
      %v222 = vmul.f32 %v204, %v220
      %v224 = vrot.slane %v222, 6
      %v226 = vsub.f32 %v219, %v224
      %v227 = vmul.f32 %v216, %v216
      %v228 = vmul.f32 %v226, %v226
      %v230 = vrot.slane %v228, 1
      %v232 = vadd.f32 %v227, %v230
      %v234 = vrot.slane %v227, 7
      %v236 = vadd.f32 %v232, %v234
      %v237 = vmax.f32 %v236, 1e-20
      %v238 = vrsqrt.pop %v237
      %v239 = vmul.f32 %v216, %v238
      %v241 = vrot.slane %v238, 7
      %v243 = vmul.f32 %v226, %v241
      %v244 = vrot.slane %v238, 1
      %v246 = vmul.f32 %v216, %v244
      %v247 = vmul.f32 %v243, %v204
      %v249 = vrot.slane %v204, 1
      %v251 = vmul.f32 %v246, %v249
      %v253 = vrot.slane %v251, 6
      %v255 = vsub.f32 %v247, %v253
      %v256 = vmul.f32 %v246, %v204
      %v257 = vmul.f32 %v239, %v249
      %v259 = vrot.slane %v257, 1
      %v261 = vsub.f32 %v256, %v259
      %v262 = vmul.f32 %v239, %v204
      %v263 = vrot.slane %v204, 6
      %v265 = vmul.f32 %v243, %v263
      %v267 = vrot.slane %v265, 1
      %v269 = vsub.f32 %v262, %v267
      %v270 = vmul.f32 %v243, %v205
      %v271 = vmul.f32 %v246, %v207
      %v273 = vrot.slane %v271, 6
      %v275 = vsub.f32 %v270, %v273
      %v276 = vmul.f32 %v246, %v205
      %v277 = vmul.f32 %v239, %v207
      %v279 = vrot.slane %v277, 1
      %v281 = vsub.f32 %v276, %v279
      %v282 = vmul.f32 %v239, %v205
      %v283 = vmul.f32 %v243, %v217
      %v285 = vrot.slane %v283, 1
      %v287 = vsub.f32 %v282, %v285
      %v289 = vrot.slane %v203, 1
      %v291 = vmul.f32 %v199, %v289
      %v292 = vrot.slane %v203, 7
      %v294 = vmul.f32 %v199, %v292
      %v296 = vrot.slane %v294, 1
      %v298 = vsub.f32 %v291, %v296
      %v299 = vrot.slane %v203, 6
      %v301 = vmul.f32 %v199, %v299
      %v302 = vrot.slane %v203, 2
      %v304 = vmul.f32 %v199, %v302
      %v306 = vrot.slane %v304, 6
      %v308 = vsub.f32 %v301, %v306
      %v310 = vrot.slane %v195, 1
      %v312 = vmul.f32 %v203, %v310
      %v313 = vrot.slane %v195, 7
      %v315 = vmul.f32 %v203, %v313
      %v317 = vrot.slane %v315, 1
      %v319 = vsub.f32 %v312, %v317
      %v320 = vrot.slane %v195, 6
      %v322 = vmul.f32 %v203, %v320
      %v323 = vrot.slane %v195, 2
      %v325 = vmul.f32 %v203, %v323
      %v327 = vrot.slane %v325, 6
      %v329 = vsub.f32 %v322, %v327
      %v331 = vrot.slane %v199, 1
      %v333 = vmul.f32 %v195, %v331
      %v334 = vrot.slane %v199, 7
      %v336 = vmul.f32 %v195, %v334
      %v338 = vrot.slane %v336, 1
      %v340 = vsub.f32 %v333, %v338
      %v341 = vrot.slane %v199, 6
      %v343 = vmul.f32 %v195, %v341
      %v344 = vrot.slane %v199, 2
      %v346 = vmul.f32 %v195, %v344
      %v348 = vrot.slane %v346, 6
      %v350 = vsub.f32 %v343, %v348
      %v352 = vrot.slane %v298, 1
      %v354 = vmul.f32 %v195, %v352
      %v356 = vrot.slane %v308, 1
      %v358 = vmul.f32 %v195, %v356
      %v360 = vrot.slane %v358, 1
      %v362 = vadd.f32 %v354, %v360
      %v363 = vrot.slane %v298, 6
      %v365 = vmul.f32 %v195, %v363
      %v367 = vrot.slane %v365, 2
      %v369 = vadd.f32 %v362, %v367
      %vm370 = vcmask 1040384
      %v371 = vsel %vm370, %v369, 0.0
      %372 = vadd.xlane.f32.xlu0 %v371
      %v373 = vpop.xlane.xlu0 %372
      %v374 = vrot.slane %v373, 4
      %v375 = vadd.f32 %v373, %v374
      %v376 = vrot.slane %v375, 2
      %v377 = vadd.f32 %v375, %v376
      %v378 = vrot.slane %v377, 1
      %v379 = vadd.f32 %v377, %v378
      %s380 = vtos %v379
      %s381 = smul.f32 %s380, 0.16666667
      %s382 = ssub.f32 %s381, 1.0408108
      %s383 = smul.f32 %s382, -2500.0
      %v384 = vrcp.pop 1.0408108
      %s385 = vtos %v384
      %s386 = smul.f32 %s383, %s385
      %s387 = smul.f32 %s386, 5.0
      %v388 = vsub.f32 %v275, %v255
      %v389 = vsub.f32 %v281, %v261
      %v390 = vsub.f32 %v287, %v269
      %v391 = vmul.f32 %v388, -15.0
      %v392 = vstv %s387
      %v393 = vmul.f32 %v392, %v298
      %v395 = vrot.slane %v393, 7
      %v397 = vadd.f32 %v391, %v395
      %v398 = vmul.f32 %v389, -15.0
      %v399 = vmul.f32 %v392, %v308
      %v401 = vrot.slane %v399, 2
      %v403 = vadd.f32 %v398, %v401
      %v404 = vmul.f32 %v390, -15.0
      %v405 = vadd.f32 %v404, %v395
      %v406 = vmul.f32 %v275, 15.0
      %v407 = vmul.f32 %v392, %v319
      %v409 = vrot.slane %v407, 7
      %v411 = vadd.f32 %v406, %v409
      %v412 = vmul.f32 %v281, 15.0
      %v413 = vmul.f32 %v392, %v329
      %v415 = vrot.slane %v413, 2
      %v417 = vadd.f32 %v412, %v415
      %v418 = vmul.f32 %v287, 15.0
      %v419 = vadd.f32 %v418, %v409
      %v420 = vmul.f32 %v255, -15.0
      %v421 = vmul.f32 %v392, %v340
      %v423 = vrot.slane %v421, 7
      %v425 = vadd.f32 %v420, %v423
      %v426 = vmul.f32 %v261, -15.0
      %v427 = vmul.f32 %v392, %v350
      %v429 = vrot.slane %v427, 2
      %v431 = vadd.f32 %v426, %v429
      %v432 = vmul.f32 %v269, -15.0
      %v433 = vadd.f32 %v432, %v423
      %v434 = vpack.c.bf16 %v397, %v397
      %v435 = vpack.c.bf16 %v403, %v403
      %v436 = vpack.c.bf16 %v405, %v405
      %v437 = vunpack.c.l.bf16 %v434
      %v438 = vsub.f32 %v397, %v437
      %v439 = vpack.c.bf16 %v438, %v438
      %v440 = vunpack.c.l.bf16 %v435
      %v441 = vsub.f32 %v403, %v440
      %v442 = vpack.c.bf16 %v441, %v441
      %v443 = vunpack.c.l.bf16 %v436
      %v444 = vsub.f32 %v405, %v443
      %v445 = vpack.c.bf16 %v444, %v444
      %v446 = vpack.c.bf16 %v411, %v411
      %v447 = vpack.c.bf16 %v417, %v417
      %v448 = vpack.c.bf16 %v419, %v419
      %v449 = vunpack.c.l.bf16 %v446
      %v450 = vsub.f32 %v411, %v449
      %v451 = vpack.c.bf16 %v450, %v450
      %v452 = vunpack.c.l.bf16 %v447
      %v453 = vsub.f32 %v417, %v452
      %v454 = vpack.c.bf16 %v453, %v453
      %v455 = vunpack.c.l.bf16 %v448
      %v456 = vsub.f32 %v419, %v455
      %v457 = vpack.c.bf16 %v456, %v456
      %v458 = vpack.c.bf16 %v425, %v425
      %v459 = vpack.c.bf16 %v431, %v431
      %v460 = vpack.c.bf16 %v433, %v433
      %v461 = vunpack.c.l.bf16 %v458
      %v462 = vsub.f32 %v425, %v461
      %v463 = vpack.c.bf16 %v462, %v462
      %v464 = vunpack.c.l.bf16 %v459
      %v465 = vsub.f32 %v431, %v464
      %v466 = vpack.c.bf16 %v465, %v465
      %v467 = vunpack.c.l.bf16 %v460
      %v468 = vsub.f32 %v433, %v467
      %v469 = vpack.c.bf16 %v468, %v468
      %v473 = vrot.slane %v434, 1
      %v474 = vrot.slane %v446, 1
      %v475 = vrot.slane %v458, 1
      %v480 = vshll.u32 %v435, 16
      %v483 = vshll.u32 %v447, 16
      %v486 = vshll.u32 %v459, 16
      %v492 = vshrl.u32 %v436, 16
      %v494 = vrot.slane %v492, 7
      %v496 = vshrl.u32 %v448, 16
      %v498 = vrot.slane %v496, 7
      %v500 = vshrl.u32 %v460, 16
      %v502 = vrot.slane %v500, 7
      %v504 = vshll.u32 %v439, 16
      %v507 = vshll.u32 %v451, 16
      %v510 = vshll.u32 %v463, 16
      %v518 = vrot.slane %v442, 6
      %v519 = vrot.slane %v454, 6
      %v520 = vrot.slane %v466, 6
      %v524 = vrot.slane %v445, 6
      %v525 = vrot.slane %v457, 6
      %v526 = vrot.slane %v469, 6
      %vm530 = vcmask 1040384
      %vm531 = vsmask.f32 256
      %vm532 = vmand %vm530, %vm531
      %v533 = vsel %vm532, %v473, %v480
      %v534 = vsel %vm532, %v474, %v483
      %v535 = vsel %vm532, %v475, %v486
      %v538 = vsel %vm370, %v533, %v494
      %v542 = vsel %vm370, %v534, %v498
      %v546 = vsel %vm370, %v535, %v502
      %v548 = vsel %vm109, %v538, %v504
      %v549 = vsel %vm109, %v542, %v507
      %v550 = vsel %vm109, %v546, %v510
      %vm551 = vcmask 1041408
      %v554 = vsel %vm551, %v548, %v518
      %v558 = vsel %vm551, %v549, %v519
      %v562 = vsel %vm551, %v550, %v520
      %vm564 = vcmask 1042432
      %vm565 = vsmask.f32 2304
      %vm566 = vmand %vm564, %vm565
      %v567 = vsel %vm566, %v554, %v524
      %v568 = vsel %vm566, %v558, %v525
      %v569 = vsel %vm566, %v562, %v526
      %570 = vmatprep.subr.bf16.mxu0 %v71
      %571 = vmatpush1.bf16.xpose.msra.mxu0 %v70
      %572 = vmatprep.subr.bf16.mxu0 %v74
      %573 = vmatpush1.bf16.xpose.msra.mxu0 %v73
      %574 = vmatprep.subr.bf16.mxu0 %v77
      %575 = vmatpush1.bf16.xpose.msra.mxu0 %v76
      %576 = vmatprep.subr.bf16.mxu0 %v80
      %577 = vmatpush1.bf16.xpose.msra.mxu0 %v79
      %578 = vmatprep.subr.bf16.mxu0 %v83
      %579 = vmatpush1.bf16.xpose.msra.mxu0 %v82
      %580 = vmatprep.subr.bf16.mxu0 %v86
      %581 = vmatpush1.bf16.xpose.msra.mxu0 %v85
      %582 = vmatprep.subr.bf16.mxu0 %v89
      %583 = vmatpush1.bf16.xpose.msra.mxu0 %v88
      %584 = vmatprep.subr.bf16.mxu0 %v92
      %585 = vmatpush1.bf16.xpose.msra.mxu0 %v91
      %586 = vmatprep.subr.bf16.mxu0 0
      %587 = vmatpush1.bf16.xpose.msra.mxu0 0
      %588 = vmatprep.subr.bf16.mxu0 0
      %589 = vmatpush1.bf16.xpose.msra.mxu0 0
      %590 = vmatprep.subr.bf16.mxu0 0
      %591 = vmatpush1.bf16.xpose.msra.mxu0 0
      %592 = vmatprep.subr.bf16.mxu0 0
      %593 = vmatpush1.bf16.xpose.msra.mxu0 0
      %594 = vmatprep.subr.bf16.mxu0 0
      %595 = vmatpush1.bf16.xpose.msra.mxu0 0
      %596 = vmatprep.subr.bf16.mxu0 0
      %597 = vmatpush1.bf16.xpose.msra.mxu0 0
      %598 = vmatprep.subr.bf16.mxu0 0
      %599 = vmatpush1.bf16.xpose.msra.mxu0 0
      %600 = vmatprep.subr.bf16.mxu0 0
      %601 = vmatpush1.bf16.xpose.msra.mxu0 0
      %602 = vmatprep.mubr.bf16.mxu0 %v568
      %603 = vmatmul.mubr.bf16.gmra.mrb[0].mxu0 %v567
      %v604 = vpop.f32.mrb[0].mxu0
      %v605 = vadd.f32 0.0, %v604
      %v606 = vpop.f32.mrb[0].mxu0
      %v607 = vpop.f32.mrb[0].mxu0
      %v608 = vpop.f32.mrb[0].mxu0
      %609 = vdwg.mxu0
      %610 = vmatprep.subr.bf16.mxu0 0
      %611 = vmatpush1.bf16.xpose.msra.mxu0 %v72
      %612 = vmatprep.subr.bf16.mxu0 0
      %613 = vmatpush1.bf16.xpose.msra.mxu0 %v75
      %614 = vmatprep.subr.bf16.mxu0 0
      %615 = vmatpush1.bf16.xpose.msra.mxu0 %v78
      %616 = vmatprep.subr.bf16.mxu0 0
      %617 = vmatpush1.bf16.xpose.msra.mxu0 %v81
      %618 = vmatprep.subr.bf16.mxu0 0
      %619 = vmatpush1.bf16.xpose.msra.mxu0 %v84
      %620 = vmatprep.subr.bf16.mxu0 0
      %621 = vmatpush1.bf16.xpose.msra.mxu0 %v87
      %622 = vmatprep.subr.bf16.mxu0 0
      %623 = vmatpush1.bf16.xpose.msra.mxu0 %v90
      %624 = vmatprep.subr.bf16.mxu0 0
      %625 = vmatpush1.bf16.xpose.msra.mxu0 %v93
      %626 = vmatprep.subr.bf16.mxu0 0
      %627 = vmatpush1.bf16.xpose.msra.mxu0 0
      %628 = vmatprep.subr.bf16.mxu0 0
      %629 = vmatpush1.bf16.xpose.msra.mxu0 0
      %630 = vmatprep.subr.bf16.mxu0 0
      %631 = vmatpush1.bf16.xpose.msra.mxu0 0
      %632 = vmatprep.subr.bf16.mxu0 0
      %633 = vmatpush1.bf16.xpose.msra.mxu0 0
      %634 = vmatprep.subr.bf16.mxu0 0
      %635 = vmatpush1.bf16.xpose.msra.mxu0 0
      %636 = vmatprep.subr.bf16.mxu0 0
      %637 = vmatpush1.bf16.xpose.msra.mxu0 0
      %638 = vmatprep.subr.bf16.mxu0 0
      %639 = vmatpush1.bf16.xpose.msra.mxu0 0
      %640 = vmatprep.subr.bf16.mxu0 0
      %641 = vmatpush1.bf16.xpose.msra.mxu0 0
      %642 = vmatprep.mubr.bf16.mxu0 0
      %643 = vmatmul.mubr.bf16.gmra.mrb[0].mxu0 %v569
      %v644 = vpop.f32.mrb[0].mxu0
      %v645 = vadd.f32 %v605, %v644
      %v646 = vpop.f32.mrb[0].mxu0
      %v647 = vpop.f32.mrb[0].mxu0
      %v648 = vpop.f32.mrb[0].mxu0
      %649 = vdwg.mxu0
      %v651 = vrot.slane %v645, 3
      %v653 = vadd.f32 %v645, %v651
      %v654 = vadd.f32 %v69, %v653
    $region14: #{tpu_custom_call.1} parent=1 // loop_footer
      %s68 = sadd.s32 1, %s64
    $region15: #{tpu_custom_call.1} parent=1 // loop_footer_branch
      %63 = sbr.rel target = $region11
    $region16: #{tpu_custom_call.1} parent=1 // loop_exit
      _
    %655 = vst [vmem:[#allocation7] sm:$0x7] %v69
    // Predicated region
    $region17: #{tpu_custom_call.1} parent=1 // pred_check
      _
    $region18: #{tpu_custom_call.1} parent=1 // pred_check_branch
      %657 = sbr.rel (0) target = $region20
    $region19: #{tpu_custom_call.1} parent=1 // pred_region
      %s659 = ssub.s32 64, 64
      %660 = vsyncadd [#allocation6], %s659
      %s662 = sshll.u32 [#allocation7], 4
      %s663 = int_to_ptr.vmem [resolvable:$true] %s662
      %665 = dma.vmem_to_hbm [thread:$0]  %s663, 64, %s2, [#allocation6]
    $region20: #{tpu_custom_call.1} parent=1 // pred_fallthru
      _
    // Predicated region
    $region21: #{tpu_custom_call.1} parent=1 // pred_check
      _
    $region22: #{tpu_custom_call.1} parent=1 // pred_check_branch
      %667 = sbr.rel (0) target = $region24
    $region23: #{tpu_custom_call.1} parent=1 // pred_region
      %668 = dma.done [#allocation6], 64
    $region24: #{tpu_custom_call.1} parent=1 // pred_fallthru
      _
    %669 = vsyncpa [#allocation5], 1
    %670 = vsyncpa [#allocation6], 1
  %671 = vsyncmov [#allocation3]
  %s672 = vpop.sfrf %671
  %p673 = scmp.eq.s32.totalorder %s672, 0
  %p674 = pneg %p673
  %676 = shalt.err (%p674)

</llo_original>
